<compile_context>
chip_gen: v7x
topology: tpu7x:2x2x1
jax: 0.10.0
libtpu: 0.0.40
codegen_flags: <defaults>
</compile_context>

<pallas_src>
import jax
import jax.numpy as jnp
import numpy as np
from jax.experimental import pallas as pl
from jax.experimental.pallas import tpu as pltpu

# --- problem sizes (small, consistent with a (b, d, m)-shaped student output) ---
B = 4          # batch size
N_IN = 16      # student input features
D = 8          # feature dim of student output
M = 16         # num_particles
DM = D * M     # 128 -> exactly one lane-dense tile width
P = N_IN * DM + DM   # total number of student parameters (W + bias), for the reference
LMBDA = 1e-6


# ----------------------------------------------------------------------------
# Fused kernel: student matmul + Sobolev matrix + loss reduction + alpha solve
# ----------------------------------------------------------------------------
def _fused_sobolev_kernel(packed_ref, w_ref, out_ref, mat_ref, alpha_ref, loss_ref):
    # ---- unpack the tiny side inputs from the single packed (3, 8, 128) buffer ----
    x = packed_ref[0][0:B, 0:N_IN]        # (4, 16)
    y = packed_ref[1][0:B, 0:D]           # (4, 8)
    bias = packed_ref[2][0:1, :]          # (1, 128)

    # ---- student forward: out = x @ W + bias ----
    out = jnp.dot(x, w_ref[...], preferred_element_type=jnp.float32) + bias   # (4, 128)
    out_ref[...] = out

    # ---- Sobolev matrix: 1/(M*B) * G G^T + lmbda*I, with G G^T = DM*(x x^T + 1) ----
    xxt = jax.lax.dot_general(
        x, x, (((1,), (1,)), ((), ())), preferred_element_type=jnp.float32
    )                                                                          # (4, 4)
    row_bb = jax.lax.broadcasted_iota(jnp.int32, (B, B), 0)
    col_bb = jax.lax.broadcasted_iota(jnp.int32, (B, B), 1)
    eye = (row_bb == col_bb).astype(jnp.float32)
    matrix = (DM / (M * B)) * (xxt + 1.0) + LMBDA * eye
    mat_ref[...] = matrix

    # ---- mean over particles via lane-dense (D, DM) = (8, 128) averaging constant ----
    d_idx = jax.lax.broadcasted_iota(jnp.int32, (D, DM), 0)
    k_idx = jax.lax.broadcasted_iota(jnp.int32, (D, DM), 1)
    s_t = jnp.where(
        (k_idx >= d_idx * M) & (k_idx < (d_idx + 1) * M),
        jnp.float32(1.0 / M),
        jnp.float32(0.0),
    )                                                                          # (8, 128)
    fake_mean = jax.lax.dot_general(
        out, s_t, (((1,), (1,)), ((), ())), preferred_element_type=jnp.float32
    )                                                                          # (4, 8)

    # ---- loss = 0.5/B * sum((y - mean(out, -1))**2) -> scalar in SMEM ----
    diff = y - fake_mean
    loss_ref[0] = 0.5 / B * jnp.sum(diff * diff)

    # ---- alpha = matrix^{-1} (mean(out,-1) - y): 4-step vectorized Gauss-Jordan ----
    # (matrix is SPD and strongly diagonal here, so no pivoting is required)
    m_vec = -diff                                                              # (4, 8)
    row_bd = jax.lax.broadcasted_iota(jnp.int32, (B, D), 0)
    col_1b = jax.lax.broadcasted_iota(jnp.int32, (1, B), 1)
    mat_cur = matrix
    rhs_cur = m_vec
    for k in range(B):                                       # static, fully unrolled
        sel_row_m = row_bb == k
        sel_row_r = row_bd == k
        piv_row_m = jnp.sum(jnp.where(sel_row_m, mat_cur, 0.0), axis=0, keepdims=True)
        piv_row_r = jnp.sum(jnp.where(sel_row_r, rhs_cur, 0.0), axis=0, keepdims=True)
        pivot = jnp.sum(jnp.where(col_1b == k, piv_row_m, 0.0), axis=1, keepdims=True)
        factors = jnp.sum(jnp.where(col_bb == k, mat_cur, 0.0), axis=1, keepdims=True)
        piv_row_m = piv_row_m / pivot
        piv_row_r = piv_row_r / pivot
        mat_cur = jnp.where(sel_row_m, piv_row_m, mat_cur - factors * piv_row_m)
        rhs_cur = jnp.where(sel_row_r, piv_row_r, rhs_cur - factors * piv_row_r)
    alpha_ref[...] = rhs_cur


def fused_sobolev(x, W, bias, y):
    # Pack the three tiny side inputs into one VMEM buffer (2 input DMAs total).
    packed = jnp.zeros((3, 8, DM), jnp.float32)
    packed = packed.at[0, :B, :N_IN].set(x)
    packed = packed.at[1, :B, :D].set(y)
    packed = packed.at[2, 0, :].set(bias)

    out_flat, matrix, alpha, loss = pl.pallas_call(
        _fused_sobolev_kernel,
        out_shape=(
            jax.ShapeDtypeStruct((B, DM), jnp.float32),   # student output (flat)
            jax.ShapeDtypeStruct((B, B), jnp.float32),    # Sobolev matrix
            jax.ShapeDtypeStruct((B, D), jnp.float32),    # alpha (detached residual)
            jax.ShapeDtypeStruct((1,), jnp.float32),      # scalar loss
        ),
        in_specs=[
            pl.BlockSpec(memory_space=pltpu.MemorySpace.VMEM),   # packed (x, y, bias)
            pl.BlockSpec(memory_space=pltpu.MemorySpace.VMEM),   # W
        ],
        out_specs=(
            pl.BlockSpec(memory_space=pltpu.MemorySpace.VMEM),
            pl.BlockSpec(memory_space=pltpu.MemorySpace.VMEM),
            pl.BlockSpec(memory_space=pltpu.MemorySpace.VMEM),
            pl.BlockSpec(memory_space=pltpu.MemorySpace.SMEM),
        ),
    )(packed, W)
    return out_flat.reshape(B, D, M), matrix, alpha, loss[0]


# ----------------------------------------------------------------------------
# Forward pass: one Pallas launch, no XLA-side solve / mean recompute.
# ----------------------------------------------------------------------------
@jax.jit
def sobolev_forward(x, y, W, bias):
    out, matrix, alpha, loss = fused_sobolev(x, W, bias, y)
    # matrix and alpha are detached in the PyTorch module (used only by the custom
    # backward); returned here to mirror what the eager forward computes.
    # TODO(synk): the custom autograd backward (sobolev.backward) is not implemented;
    # this script covers the forward pass only.
    return loss, (out, jax.lax.stop_gradient(matrix), jax.lax.stop_gradient(alpha))


if __name__ == "__main__":
    key = jax.random.PRNGKey(0)
    kx, ky, kw, kb = jax.random.split(key, 4)

    x = jax.random.normal(kx, (B, N_IN), dtype=jnp.float32)
    y = jax.random.normal(ky, (B, D), dtype=jnp.float32)
    # deterministic synthetic student parameters
    W = 0.1 * jax.random.normal(kw, (N_IN, DM), dtype=jnp.float32)
    bias = 0.01 * jax.random.normal(kb, (DM,), dtype=jnp.float32)

    loss, (out, matrix, alpha) = sobolev_forward(x, y, W, bias)
    jax.block_until_ready((loss, out, matrix, alpha))

    # --- pure-JAX / numpy references ---
    out_ref = (x @ W + bias).reshape(B, D, M)
    loss_ref = 0.5 / B * jnp.sum((y - jnp.mean(out_ref, axis=-1)) ** 2)

    # Per-sample parameter grads of sum(out[i]) for the linear+bias student
    # (same semantics as PyTorch compute_grad) to validate the analytic gram identity.
    grad_W = jnp.repeat(x, DM, axis=1)                        # dF_i/dW[j,k] = x[i, j]
    grad_b = jnp.ones((B, DM), dtype=jnp.float32)             # dF_i/dbias[k] = 1
    grad_out_ref = jnp.concatenate([grad_W, grad_b], axis=1)  # (B, P)
    assert grad_out_ref.shape == (B, P)
    matrix_ref = (1.0 / (M * B)) * (grad_out_ref @ grad_out_ref.T) + LMBDA * jnp.eye(B)

    m_vec_ref = jnp.mean(out_ref, axis=-1) - y
    alpha_ref = np.linalg.solve(
        np.asarray(matrix_ref, np.float64), np.asarray(m_vec_ref, np.float64)
    )

    assert jnp.allclose(out, out_ref, rtol=1e-5, atol=1e-5)
    assert jnp.allclose(matrix, matrix_ref, rtol=1e-5, atol=1e-5), (matrix, matrix_ref)
    assert jnp.allclose(loss, loss_ref, rtol=1e-5, atol=1e-5), (loss, loss_ref)
    assert jnp.allclose(
        alpha, jnp.asarray(alpha_ref, jnp.float32), rtol=1e-4, atol=3e-5
    ), (alpha, alpha_ref)

    print("KERNEL_OK")
</pallas_src>

<mosaic_0001>
module attributes {stable_mosaic.version = 11 : i64} {
  func.func @_fused_sobolev_kernel(%arg0: memref<3x8x128xf32, #tpu.memory_space<vmem>>, %arg1: memref<16x128xf32, #tpu.memory_space<vmem>>, %arg2: memref<4x128xf32, #tpu.memory_space<vmem>>, %arg3: memref<4x4xf32, #tpu.memory_space<vmem>>, %arg4: memref<4x8xf32, #tpu.memory_space<vmem>>, %arg5: memref<1xf32, #tpu.memory_space<smem>>) attributes {dimension_semantics = [], scalar_prefetch = 0 : i64, scratch_operands = 0 : i64, tpu.core_type = #tpu.core_type<tc>} {
    %c0 = arith.constant 0 : index
    %c0_0 = arith.constant 0 : index
    %c0_1 = arith.constant 0 : index
    %0 = vector.load %arg0[%c0, %c0_0, %c0_1] : memref<3x8x128xf32, #tpu.memory_space<vmem>>, vector<1x8x128xf32>
    %1 = vector.shape_cast %0 : vector<1x8x128xf32> to vector<8x128xf32>
    %2 = vector.extract_strided_slice %1 {offsets = [0, 0], sizes = [4, 16], strides = [1, 1]} : vector<8x128xf32> to vector<4x16xf32>
    %c1 = arith.constant 1 : index
    %c0_2 = arith.constant 0 : index
    %c0_3 = arith.constant 0 : index
    %3 = vector.load %arg0[%c1, %c0_2, %c0_3] : memref<3x8x128xf32, #tpu.memory_space<vmem>>, vector<1x8x128xf32>
    %4 = vector.shape_cast %3 : vector<1x8x128xf32> to vector<8x128xf32>
    %5 = vector.extract_strided_slice %4 {offsets = [0, 0], sizes = [4, 8], strides = [1, 1]} : vector<8x128xf32> to vector<4x8xf32>
    %c2 = arith.constant 2 : index
    %c0_4 = arith.constant 0 : index
    %c0_5 = arith.constant 0 : index
    %6 = vector.load %arg0[%c2, %c0_4, %c0_5] : memref<3x8x128xf32, #tpu.memory_space<vmem>>, vector<1x8x128xf32>
    %7 = vector.shape_cast %6 : vector<1x8x128xf32> to vector<8x128xf32>
    %8 = vector.extract_strided_slice %7 {offsets = [0, 0], sizes = [1, 128], strides = [1, 1]} : vector<8x128xf32> to vector<1x128xf32>
    %c0_6 = arith.constant 0 : index
    %c0_7 = arith.constant 0 : index
    %9 = vector.load %arg1[%c0_6, %c0_7] : memref<16x128xf32, #tpu.memory_space<vmem>>, vector<16x128xf32>
    %cst = arith.constant dense<0.000000e+00> : vector<4x128xf32>
    %10 = tpu.matmul %2, %9, %cst {dimension_numbers = #tpu.dot_dimension_numbers<[1], [0], [0], [1], [0, 0, 1, 1], [], []>} : vector<4x16xf32>, vector<16x128xf32>, vector<4x128xf32> -> vector<4x128xf32>
    %11 = vector.broadcast %8 : vector<1x128xf32> to vector<4x128xf32>
    %12 = arith.addf %10, %11 : vector<4x128xf32>
    %c0_8 = arith.constant 0 : index
    %c0_9 = arith.constant 0 : index
    %13 = vector.load %arg2[%c0_8, %c0_9] : memref<4x128xf32, #tpu.memory_space<vmem>>, vector<4x128xf32>
    tpu.vector_store %arg2[%c0_8, %c0_9], %12 {strides = array<i32>} : memref<4x128xf32, #tpu.memory_space<vmem>>, vector<4x128xf32>,
    %cst_10 = arith.constant dense<0.000000e+00> : vector<4x4xf32>
    %14 = tpu.matmul %2, %2, %cst_10 {dimension_numbers = #tpu.dot_dimension_numbers<[1], [1], [0], [0], [0, 0, 1, 0], [], []>} : vector<4x16xf32>, vector<4x16xf32>, vector<4x4xf32> -> vector<4x4xf32>
    %15 = tpu.iota {dimensions = array<i32: 0>} : vector<4x4xi32>
    %16 = tpu.iota {dimensions = array<i32: 1>} : vector<4x4xi32>
    %17 = arith.cmpi eq, %15, %16 : vector<4x4xi32>
    %18 = arith.extui %17 : vector<4x4xi1> to vector<4x4xi32>
    %19 = arith.sitofp %18 : vector<4x4xi32> to vector<4x4xf32>
    %cst_11 = arith.constant 1.000000e+00 : f32
    %20 = vector.broadcast %cst_11 : f32 to vector<4x4xf32>
    %21 = arith.addf %14, %20 : vector<4x4xf32>
    %cst_12 = arith.constant 2.000000e+00 : f32
    %22 = vector.broadcast %cst_12 : f32 to vector<4x4xf32>
    %23 = arith.mulf %22, %21 : vector<4x4xf32>
    %cst_13 = arith.constant 9.99999997E-7 : f32
    %24 = vector.broadcast %cst_13 : f32 to vector<4x4xf32>
    %25 = arith.mulf %24, %19 : vector<4x4xf32>
    %26 = arith.addf %23, %25 : vector<4x4xf32>
    %c0_14 = arith.constant 0 : index
    %c0_15 = arith.constant 0 : index
    %27 = vector.load %arg3[%c0_14, %c0_15] : memref<4x4xf32, #tpu.memory_space<vmem>>, vector<4x4xf32>
    tpu.vector_store %arg3[%c0_14, %c0_15], %26 {strides = array<i32>} : memref<4x4xf32, #tpu.memory_space<vmem>>, vector<4x4xf32>,
    %28 = tpu.iota {dimensions = array<i32: 0>} : vector<8x128xi32>
    %29 = tpu.iota {dimensions = array<i32: 1>} : vector<8x128xi32>
    %c16_i32 = arith.constant 16 : i32
    %30 = vector.broadcast %c16_i32 : i32 to vector<8x128xi32>
    %31 = arith.muli %28, %30 : vector<8x128xi32>
    %32 = arith.cmpi sge, %29, %31 : vector<8x128xi32>
    %c1_i32 = arith.constant 1 : i32
    %33 = vector.broadcast %c1_i32 : i32 to vector<8x128xi32>
    %34 = arith.addi %28, %33 : vector<8x128xi32>
    %c16_i32_16 = arith.constant 16 : i32
    %35 = vector.broadcast %c16_i32_16 : i32 to vector<8x128xi32>
    %36 = arith.muli %34, %35 : vector<8x128xi32>
    %37 = arith.cmpi slt, %29, %36 : vector<8x128xi32>
    %38 = arith.andi %32, %37 : vector<8x128xi1>
    %cst_17 = arith.constant 6.250000e-02 : f32
    %cst_18 = arith.constant 0.000000e+00 : f32
    %39 = vector.broadcast %cst_17 : f32 to vector<8x128xf32>
    %40 = vector.broadcast %cst_18 : f32 to vector<8x128xf32>
    %41 = arith.select %38, %39, %40 : vector<8x128xi1>, vector<8x128xf32>
    %cst_19 = arith.constant dense<0.000000e+00> : vector<4x8xf32>
    %42 = tpu.matmul %12, %41, %cst_19 {dimension_numbers = #tpu.dot_dimension_numbers<[1], [1], [0], [0], [0, 0, 1, 0], [], []>} : vector<4x128xf32>, vector<8x128xf32>, vector<4x8xf32> -> vector<4x8xf32>
    %43 = arith.subf %5, %42 : vector<4x8xf32>
    %44 = arith.mulf %43, %43 : vector<4x8xf32>
    %45 = vector.shape_cast %44 : vector<4x8xf32> to vector<1x4x8xf32>
    %cst_20 = arith.constant dense<0.000000e+00> : vector<1xf32>
    %46 = vector.multi_reduction <add>, %45, %cst_20 [1, 2] : vector<1x4x8xf32> to vector<1xf32>
    %47 = vector.shape_cast %46 : vector<1xf32> to vector<1x1x1xf32>
    %48 = vector.extract %47[0, 0, 0] : f32 from vector<1x1x1xf32>
    %cst_21 = arith.constant 1.250000e-01 : f32
    %49 = arith.mulf %cst_21, %48 : f32
    %c0_22 = arith.constant 0 : index
    %50 = memref.load %arg5[%c0_22] : memref<1xf32, #tpu.memory_space<smem>>
    memref.store %49, %arg5[%c0_22] : memref<1xf32, #tpu.memory_space<smem>>
    %cst_23 = arith.constant 0.000000e+00 : f32
    %51 = vector.broadcast %cst_23 : f32 to vector<4x8xf32>
    %52 = arith.subf %51, %43 : vector<4x8xf32>
    %53 = tpu.iota {dimensions = array<i32: 0>} : vector<4x8xi32>
    %54 = tpu.iota {dimensions = array<i32: 1>} : vector<1x4xi32>
    %c0_i32 = arith.constant 0 : i32
    %55 = vector.broadcast %c0_i32 : i32 to vector<4x4xi32>
    %56 = arith.cmpi eq, %15, %55 : vector<4x4xi32>
    %c0_i32_24 = arith.constant 0 : i32
    %57 = vector.broadcast %c0_i32_24 : i32 to vector<4x8xi32>
    %58 = arith.cmpi eq, %53, %57 : vector<4x8xi32>
    %cst_25 = arith.constant 0.000000e+00 : f32
    %59 = vector.broadcast %cst_25 : f32 to vector<4x4xf32>
    %60 = arith.select %56, %26, %59 : vector<4x4xi1>, vector<4x4xf32>
    %cst_26 = arith.constant dense<0.000000e+00> : vector<4xf32>
    %61 = vector.multi_reduction <add>, %60, %cst_26 [0] : vector<4x4xf32> to vector<4xf32>
    %62 = vector.shape_cast %61 : vector<4xf32> to vector<1x4xf32>
    %cst_27 = arith.constant 0.000000e+00 : f32
    %63 = vector.broadcast %cst_27 : f32 to vector<4x8xf32>
    %64 = arith.select %58, %52, %63 : vector<4x8xi1>, vector<4x8xf32>
    %cst_28 = arith.constant dense<0.000000e+00> : vector<8xf32>
    %65 = vector.multi_reduction <add>, %64, %cst_28 [0] : vector<4x8xf32> to vector<8xf32>
    %66 = vector.shape_cast %65 : vector<8xf32> to vector<1x8xf32>
    %c0_i32_29 = arith.constant 0 : i32
    %67 = vector.broadcast %c0_i32_29 : i32 to vector<1x4xi32>
    %68 = arith.cmpi eq, %54, %67 : vector<1x4xi32>
    %cst_30 = arith.constant 0.000000e+00 : f32
    %69 = vector.broadcast %cst_30 : f32 to vector<1x4xf32>
    %70 = arith.select %68, %62, %69 : vector<1x4xi1>, vector<1x4xf32>
    %cst_31 = arith.constant dense<0.000000e+00> : vector<1xf32>
    %71 = vector.multi_reduction <add>, %70, %cst_31 [1] : vector<1x4xf32> to vector<1xf32>
    %72 = vector.shape_cast %71 : vector<1xf32> to vector<1x1xf32>
    %c0_i32_32 = arith.constant 0 : i32
    %73 = vector.broadcast %c0_i32_32 : i32 to vector<4x4xi32>
    %74 = arith.cmpi eq, %16, %73 : vector<4x4xi32>
    %cst_33 = arith.constant 0.000000e+00 : f32
    %75 = vector.broadcast %cst_33 : f32 to vector<4x4xf32>
    %76 = arith.select %74, %26, %75 : vector<4x4xi1>, vector<4x4xf32>
    %cst_34 = arith.constant dense<0.000000e+00> : vector<4xf32>
    %77 = vector.multi_reduction <add>, %76, %cst_34 [1] : vector<4x4xf32> to vector<4xf32>
    %78 = vector.shape_cast %77 : vector<4xf32> to vector<4x1xf32>
    %79 = vector.broadcast %72 : vector<1x1xf32> to vector<1x4xf32>
    %80 = arith.divf %62, %79 : vector<1x4xf32>
    %81 = vector.broadcast %72 : vector<1x1xf32> to vector<1x8xf32>
    %82 = arith.divf %66, %81 : vector<1x8xf32>
    %83 = vector.broadcast %78 : vector<4x1xf32> to vector<4x4xf32>
    %84 = vector.broadcast %80 : vector<1x4xf32> to vector<4x4xf32>
    %85 = arith.mulf %83, %84 : vector<4x4xf32>
    %86 = arith.subf %26, %85 : vector<4x4xf32>
    %87 = vector.shape_cast %80 : vector<1x4xf32> to vector<1x4xf32>
    %88 = vector.broadcast %87 : vector<1x4xf32> to vector<4x4xf32>
    %89 = arith.select %56, %88, %86 : vector<4x4xi1>, vector<4x4xf32>
    %90 = vector.broadcast %78 : vector<4x1xf32> to vector<4x8xf32>
    %91 = vector.broadcast %82 : vector<1x8xf32> to vector<4x8xf32>
    %92 = arith.mulf %90, %91 : vector<4x8xf32>
    %93 = arith.subf %52, %92 : vector<4x8xf32>
    %94 = vector.shape_cast %82 : vector<1x8xf32> to vector<1x8xf32>
    %95 = vector.broadcast %94 : vector<1x8xf32> to vector<4x8xf32>
    %96 = arith.select %58, %95, %93 : vector<4x8xi1>, vector<4x8xf32>
    %c1_i32_35 = arith.constant 1 : i32
    %97 = vector.broadcast %c1_i32_35 : i32 to vector<4x4xi32>
    %98 = arith.cmpi eq, %15, %97 : vector<4x4xi32>
    %c1_i32_36 = arith.constant 1 : i32
    %99 = vector.broadcast %c1_i32_36 : i32 to vector<4x8xi32>
    %100 = arith.cmpi eq, %53, %99 : vector<4x8xi32>
    %cst_37 = arith.constant 0.000000e+00 : f32
    %101 = vector.broadcast %cst_37 : f32 to vector<4x4xf32>
    %102 = arith.select %98, %89, %101 : vector<4x4xi1>, vector<4x4xf32>
    %cst_38 = arith.constant dense<0.000000e+00> : vector<4xf32>
    %103 = vector.multi_reduction <add>, %102, %cst_38 [0] : vector<4x4xf32> to vector<4xf32>
    %104 = vector.shape_cast %103 : vector<4xf32> to vector<1x4xf32>
    %cst_39 = arith.constant 0.000000e+00 : f32
    %105 = vector.broadcast %cst_39 : f32 to vector<4x8xf32>
    %106 = arith.select %100, %96, %105 : vector<4x8xi1>, vector<4x8xf32>
    %cst_40 = arith.constant dense<0.000000e+00> : vector<8xf32>
    %107 = vector.multi_reduction <add>, %106, %cst_40 [0] : vector<4x8xf32> to vector<8xf32>
    %108 = vector.shape_cast %107 : vector<8xf32> to vector<1x8xf32>
    %c1_i32_41 = arith.constant 1 : i32
    %109 = vector.broadcast %c1_i32_41 : i32 to vector<1x4xi32>
    %110 = arith.cmpi eq, %54, %109 : vector<1x4xi32>
    %cst_42 = arith.constant 0.000000e+00 : f32
    %111 = vector.broadcast %cst_42 : f32 to vector<1x4xf32>
    %112 = arith.select %110, %104, %111 : vector<1x4xi1>, vector<1x4xf32>
    %cst_43 = arith.constant dense<0.000000e+00> : vector<1xf32>
    %113 = vector.multi_reduction <add>, %112, %cst_43 [1] : vector<1x4xf32> to vector<1xf32>
    %114 = vector.shape_cast %113 : vector<1xf32> to vector<1x1xf32>
    %c1_i32_44 = arith.constant 1 : i32
    %115 = vector.broadcast %c1_i32_44 : i32 to vector<4x4xi32>
    %116 = arith.cmpi eq, %16, %115 : vector<4x4xi32>
    %cst_45 = arith.constant 0.000000e+00 : f32
    %117 = vector.broadcast %cst_45 : f32 to vector<4x4xf32>
    %118 = arith.select %116, %89, %117 : vector<4x4xi1>, vector<4x4xf32>
    %cst_46 = arith.constant dense<0.000000e+00> : vector<4xf32>
    %119 = vector.multi_reduction <add>, %118, %cst_46 [1] : vector<4x4xf32> to vector<4xf32>
    %120 = vector.shape_cast %119 : vector<4xf32> to vector<4x1xf32>
    %121 = vector.broadcast %114 : vector<1x1xf32> to vector<1x4xf32>
    %122 = arith.divf %104, %121 : vector<1x4xf32>
    %123 = vector.broadcast %114 : vector<1x1xf32> to vector<1x8xf32>
    %124 = arith.divf %108, %123 : vector<1x8xf32>
    %125 = vector.broadcast %120 : vector<4x1xf32> to vector<4x4xf32>
    %126 = vector.broadcast %122 : vector<1x4xf32> to vector<4x4xf32>
    %127 = arith.mulf %125, %126 : vector<4x4xf32>
    %128 = arith.subf %89, %127 : vector<4x4xf32>
    %129 = vector.shape_cast %122 : vector<1x4xf32> to vector<1x4xf32>
    %130 = vector.broadcast %129 : vector<1x4xf32> to vector<4x4xf32>
    %131 = arith.select %98, %130, %128 : vector<4x4xi1>, vector<4x4xf32>
    %132 = vector.broadcast %120 : vector<4x1xf32> to vector<4x8xf32>
    %133 = vector.broadcast %124 : vector<1x8xf32> to vector<4x8xf32>
    %134 = arith.mulf %132, %133 : vector<4x8xf32>
    %135 = arith.subf %96, %134 : vector<4x8xf32>
    %136 = vector.shape_cast %124 : vector<1x8xf32> to vector<1x8xf32>
    %137 = vector.broadcast %136 : vector<1x8xf32> to vector<4x8xf32>
    %138 = arith.select %100, %137, %135 : vector<4x8xi1>, vector<4x8xf32>
    %c2_i32 = arith.constant 2 : i32
    %139 = vector.broadcast %c2_i32 : i32 to vector<4x4xi32>
    %140 = arith.cmpi eq, %15, %139 : vector<4x4xi32>
    %c2_i32_47 = arith.constant 2 : i32
    %141 = vector.broadcast %c2_i32_47 : i32 to vector<4x8xi32>
    %142 = arith.cmpi eq, %53, %141 : vector<4x8xi32>
    %cst_48 = arith.constant 0.000000e+00 : f32
    %143 = vector.broadcast %cst_48 : f32 to vector<4x4xf32>
    %144 = arith.select %140, %131, %143 : vector<4x4xi1>, vector<4x4xf32>
    %cst_49 = arith.constant dense<0.000000e+00> : vector<4xf32>
    %145 = vector.multi_reduction <add>, %144, %cst_49 [0] : vector<4x4xf32> to vector<4xf32>
    %146 = vector.shape_cast %145 : vector<4xf32> to vector<1x4xf32>
    %cst_50 = arith.constant 0.000000e+00 : f32
    %147 = vector.broadcast %cst_50 : f32 to vector<4x8xf32>
    %148 = arith.select %142, %138, %147 : vector<4x8xi1>, vector<4x8xf32>
    %cst_51 = arith.constant dense<0.000000e+00> : vector<8xf32>
    %149 = vector.multi_reduction <add>, %148, %cst_51 [0] : vector<4x8xf32> to vector<8xf32>
    %150 = vector.shape_cast %149 : vector<8xf32> to vector<1x8xf32>
    %c2_i32_52 = arith.constant 2 : i32
    %151 = vector.broadcast %c2_i32_52 : i32 to vector<1x4xi32>
    %152 = arith.cmpi eq, %54, %151 : vector<1x4xi32>
    %cst_53 = arith.constant 0.000000e+00 : f32
    %153 = vector.broadcast %cst_53 : f32 to vector<1x4xf32>
    %154 = arith.select %152, %146, %153 : vector<1x4xi1>, vector<1x4xf32>
    %cst_54 = arith.constant dense<0.000000e+00> : vector<1xf32>
    %155 = vector.multi_reduction <add>, %154, %cst_54 [1] : vector<1x4xf32> to vector<1xf32>
    %156 = vector.shape_cast %155 : vector<1xf32> to vector<1x1xf32>
    %c2_i32_55 = arith.constant 2 : i32
    %157 = vector.broadcast %c2_i32_55 : i32 to vector<4x4xi32>
    %158 = arith.cmpi eq, %16, %157 : vector<4x4xi32>
    %cst_56 = arith.constant 0.000000e+00 : f32
    %159 = vector.broadcast %cst_56 : f32 to vector<4x4xf32>
    %160 = arith.select %158, %131, %159 : vector<4x4xi1>, vector<4x4xf32>
    %cst_57 = arith.constant dense<0.000000e+00> : vector<4xf32>
    %161 = vector.multi_reduction <add>, %160, %cst_57 [1] : vector<4x4xf32> to vector<4xf32>
    %162 = vector.shape_cast %161 : vector<4xf32> to vector<4x1xf32>
    %163 = vector.broadcast %156 : vector<1x1xf32> to vector<1x4xf32>
    %164 = arith.divf %146, %163 : vector<1x4xf32>
    %165 = vector.broadcast %156 : vector<1x1xf32> to vector<1x8xf32>
    %166 = arith.divf %150, %165 : vector<1x8xf32>
    %167 = vector.broadcast %162 : vector<4x1xf32> to vector<4x4xf32>
    %168 = vector.broadcast %164 : vector<1x4xf32> to vector<4x4xf32>
    %169 = arith.mulf %167, %168 : vector<4x4xf32>
    %170 = arith.subf %131, %169 : vector<4x4xf32>
    %171 = vector.shape_cast %164 : vector<1x4xf32> to vector<1x4xf32>
    %172 = vector.broadcast %171 : vector<1x4xf32> to vector<4x4xf32>
    %173 = arith.select %140, %172, %170 : vector<4x4xi1>, vector<4x4xf32>
    %174 = vector.broadcast %162 : vector<4x1xf32> to vector<4x8xf32>
    %175 = vector.broadcast %166 : vector<1x8xf32> to vector<4x8xf32>
    %176 = arith.mulf %174, %175 : vector<4x8xf32>
    %177 = arith.subf %138, %176 : vector<4x8xf32>
    %178 = vector.shape_cast %166 : vector<1x8xf32> to vector<1x8xf32>
    %179 = vector.broadcast %178 : vector<1x8xf32> to vector<4x8xf32>
    %180 = arith.select %142, %179, %177 : vector<4x8xi1>, vector<4x8xf32>
    %c3_i32 = arith.constant 3 : i32
    %181 = vector.broadcast %c3_i32 : i32 to vector<4x4xi32>
    %182 = arith.cmpi eq, %15, %181 : vector<4x4xi32>
    %c3_i32_58 = arith.constant 3 : i32
    %183 = vector.broadcast %c3_i32_58 : i32 to vector<4x8xi32>
    %184 = arith.cmpi eq, %53, %183 : vector<4x8xi32>
    %cst_59 = arith.constant 0.000000e+00 : f32
    %185 = vector.broadcast %cst_59 : f32 to vector<4x4xf32>
    %186 = arith.select %182, %173, %185 : vector<4x4xi1>, vector<4x4xf32>
    %cst_60 = arith.constant dense<0.000000e+00> : vector<4xf32>
    %187 = vector.multi_reduction <add>, %186, %cst_60 [0] : vector<4x4xf32> to vector<4xf32>
    %188 = vector.shape_cast %187 : vector<4xf32> to vector<1x4xf32>
    %cst_61 = arith.constant 0.000000e+00 : f32
    %189 = vector.broadcast %cst_61 : f32 to vector<4x8xf32>
    %190 = arith.select %184, %180, %189 : vector<4x8xi1>, vector<4x8xf32>
    %cst_62 = arith.constant dense<0.000000e+00> : vector<8xf32>
    %191 = vector.multi_reduction <add>, %190, %cst_62 [0] : vector<4x8xf32> to vector<8xf32>
    %192 = vector.shape_cast %191 : vector<8xf32> to vector<1x8xf32>
    %c3_i32_63 = arith.constant 3 : i32
    %193 = vector.broadcast %c3_i32_63 : i32 to vector<1x4xi32>
    %194 = arith.cmpi eq, %54, %193 : vector<1x4xi32>
    %cst_64 = arith.constant 0.000000e+00 : f32
    %195 = vector.broadcast %cst_64 : f32 to vector<1x4xf32>
    %196 = arith.select %194, %188, %195 : vector<1x4xi1>, vector<1x4xf32>
    %cst_65 = arith.constant dense<0.000000e+00> : vector<1xf32>
    %197 = vector.multi_reduction <add>, %196, %cst_65 [1] : vector<1x4xf32> to vector<1xf32>
    %198 = vector.shape_cast %197 : vector<1xf32> to vector<1x1xf32>
    %c3_i32_66 = arith.constant 3 : i32
    %199 = vector.broadcast %c3_i32_66 : i32 to vector<4x4xi32>
    %200 = arith.cmpi eq, %16, %199 : vector<4x4xi32>
    %cst_67 = arith.constant 0.000000e+00 : f32
    %201 = vector.broadcast %cst_67 : f32 to vector<4x4xf32>
    %202 = arith.select %200, %173, %201 : vector<4x4xi1>, vector<4x4xf32>
    %cst_68 = arith.constant dense<0.000000e+00> : vector<4xf32>
    %203 = vector.multi_reduction <add>, %202, %cst_68 [1] : vector<4x4xf32> to vector<4xf32>
    %204 = vector.shape_cast %203 : vector<4xf32> to vector<4x1xf32>
    %205 = vector.broadcast %198 : vector<1x1xf32> to vector<1x8xf32>
    %206 = arith.divf %192, %205 : vector<1x8xf32>
    %207 = vector.broadcast %204 : vector<4x1xf32> to vector<4x8xf32>
    %208 = vector.broadcast %206 : vector<1x8xf32> to vector<4x8xf32>
    %209 = arith.mulf %207, %208 : vector<4x8xf32>
    %210 = arith.subf %180, %209 : vector<4x8xf32>
    %211 = vector.shape_cast %206 : vector<1x8xf32> to vector<1x8xf32>
    %212 = vector.broadcast %211 : vector<1x8xf32> to vector<4x8xf32>
    %213 = arith.select %184, %212, %210 : vector<4x8xi1>, vector<4x8xf32>
    %c0_69 = arith.constant 0 : index
    %c0_70 = arith.constant 0 : index
    %214 = vector.load %arg4[%c0_69, %c0_70] : memref<4x8xf32, #tpu.memory_space<vmem>>, vector<4x8xf32>
    tpu.vector_store %arg4[%c0_69, %c0_70], %213 {strides = array<i32>} : memref<4x8xf32, #tpu.memory_space<vmem>>, vector<4x8xf32>,
    return
  }
}

</mosaic_0001>

<llo_original>
// kernel: sobolev_forward.1
$region0: #{sobolev_forward.1}
  #allocation0 [shape = 'u32[]', space=smem, size = 0x4, offset = 0x4, fixed_abs, tag = 'smem constant byte address 0x4 - core index']
  #allocation1 [shape = 'u32[144,128]{1,0:T(1,128)}', space=vmem, size = 0x12000, scoped, tag = 'internal scratch']
  %s0 = inlined_call_operand.vmem [shape: f32[3,8,128], index: 0, kind: input, shape index: {}]
  %s1 = inlined_call_operand.vmem [shape: f32[16,128], index: 1, kind: input, shape index: {}]
  %s2 = inlined_call_operand.vmem [shape: f32[4,128], index: 2, kind: output, shape index: {0}]
  %s3 = inlined_call_operand.hbm [shape: f32[4,4], index: 3, kind: output, shape index: {1}]
  %s4 = inlined_call_operand.hbm [shape: f32[4,8], index: 4, kind: output, shape index: {2}]
  %s5 = inlined_call_operand.hbm [shape: f32[1], index: 5, kind: output, shape index: {3}]
  %6 = xla_tuple %s2, %s3, %s4, %s5
  %s7 = sld [smem:[#allocation0]]
  $region42: #{sobolev_forward.1} parent=0
    _
  %s9 = ssub.s32 1, %s7
  %s10 = scalar_select 0, %s9, %s7
  $region1: #{sobolev_forward.1} parent=0
    #allocation2 [shape = 'u8[2048]{0}', space=vmem, size = 0x800, scoped, tag = 'output window, operand 1, single buffered']
    #allocation3 [shape = 's32[1]{0}', space=sflag, size = 0x4, scoped, tag = 'scoped memory for sobolev_forward.1']
    #allocation4 [shape = 's32[1]{0}', space=sflag, size = 0x4, scoped, tag = 'scoped memory for sobolev_forward.1']
    #allocation5 [shape = 'u8[2048]{0}', space=vmem, size = 0x800, scoped, tag = 'output window, operand 2, single buffered']
    #allocation6 [shape = 's32[1]{0}', space=sflag, size = 0x4, scoped, tag = 'scoped memory for sobolev_forward.1']
    #allocation7 [shape = 'u8[512]{0}', space=smem, size = 0x200, scoped, tag = 'output window, operand 3, single buffered']
    %11 = vsyncpa [#allocation3], 0
    %12 = vsyncpa [#allocation6], 0
    %13 = vsyncpa [#allocation4], 0
    // Predicated region
    $region2: #{sobolev_forward.1} parent=1 // pred_check
      _
    $region3: #{sobolev_forward.1} parent=1 // pred_check_branch
      %15 = sbr.rel (0) target = $region5
    $region4: #{sobolev_forward.1} parent=1 // pred_region
      _
    $region5: #{sobolev_forward.1} parent=1 // pred_fallthru
      _
    // Predicated region
    $region6: #{sobolev_forward.1} parent=1 // pred_check
      _
    $region7: #{sobolev_forward.1} parent=1 // pred_check_branch
      %17 = sbr.rel (0) target = $region9
    $region8: #{sobolev_forward.1} parent=1 // pred_region
      _
    $region9: #{sobolev_forward.1} parent=1 // pred_fallthru
      _
    %v18 = vld [vmem:[%s0] sm:$0xff]
    %s19 = scalar_lea.vmem %s0, 8
    %v20 = vld [vmem:[%s19] sm:$0xff]
    %s21 = scalar_lea.vmem %s0, 16
    %v22 = vld [vmem:[%s21] sm:$0xff]
    %v23 = vld [vmem:[%s1] sm:$0xff]
    %v24 = vld [vmem:[%s1 + $0x8] sm:$0xff]
    %v25 = vlaneseq
    %v26 = vshrl.u32 %v25, 7
    %v27 = vsub.s32 0, %v26
    %v28 = vrot.slane %v22, %v27
    %vm29 = vcmask 130048
    %v31 = vsel %vm29, %v18, 0
    %33 = vmatprep.subr.mxu0 0.0
    %34 = vmatpush1.msra.mxu0 %v23
    %35 = vmatprep.subr.mxu0 0.0
    %36 = vmatpush1.msra.mxu0 %v24
    %37 = vmatprep.subr.mxu0 0.0
    %38 = vmatpush1.msra.mxu0 0.0
    %39 = vmatprep.subr.mxu0 0.0
    %40 = vmatpush1.msra.mxu0 0.0
    %41 = vmatprep.subr.mxu0 0.0
    %42 = vmatpush1.msra.mxu0 0.0
    %43 = vmatprep.subr.mxu0 0.0
    %44 = vmatpush1.msra.mxu0 0.0
    %45 = vmatprep.subr.mxu0 0.0
    %46 = vmatpush1.msra.mxu0 0.0
    %47 = vmatprep.subr.mxu0 0.0
    %48 = vmatpush1.msra.mxu0 0.0
    %49 = vmatprep.subr.mxu0 0.0
    %50 = vmatpush1.msra.mxu0 0.0
    %51 = vmatprep.subr.mxu0 0.0
    %52 = vmatpush1.msra.mxu0 0.0
    %53 = vmatprep.subr.mxu0 0.0
    %54 = vmatpush1.msra.mxu0 0.0
    %55 = vmatprep.subr.mxu0 0.0
    %56 = vmatpush1.msra.mxu0 0.0
    %57 = vmatprep.subr.mxu0 0.0
    %58 = vmatpush1.msra.mxu0 0.0
    %59 = vmatprep.subr.mxu0 0.0
    %60 = vmatpush1.msra.mxu0 0.0
    %61 = vmatprep.subr.mxu0 0.0
    %62 = vmatpush1.msra.mxu0 0.0
    %63 = vmatprep.subr.mxu0 0.0
    %64 = vmatpush1.msra.mxu0 0.0
    %65 = vmatprep.subr.mxu0 0.0
    %66 = vmatpush1.msra.mxu0 0.0
    %67 = vmatprep.subr.mxu0 0.0
    %68 = vmatpush1.msra.mxu0 0.0
    %69 = vmatprep.subr.mxu0 0.0
    %70 = vmatpush1.msra.mxu0 0.0
    %71 = vmatprep.subr.mxu0 0.0
    %72 = vmatpush1.msra.mxu0 0.0
    %73 = vmatprep.subr.mxu0 0.0
    %74 = vmatpush1.msra.mxu0 0.0
    %75 = vmatprep.subr.mxu0 0.0
    %76 = vmatpush1.msra.mxu0 0.0
    %77 = vmatprep.subr.mxu0 0.0
    %78 = vmatpush1.msra.mxu0 0.0
    %79 = vmatprep.subr.mxu0 0.0
    %80 = vmatpush1.msra.mxu0 0.0
    %81 = vmatprep.subr.mxu0 0.0
    %82 = vmatpush1.msra.mxu0 0.0
    %83 = vmatprep.subr.mxu0 0.0
    %84 = vmatpush1.msra.mxu0 0.0
    %85 = vmatprep.subr.mxu0 0.0
    %86 = vmatpush1.msra.mxu0 0.0
    %87 = vmatprep.subr.mxu0 0.0
    %88 = vmatpush1.msra.mxu0 0.0
    %89 = vmatprep.subr.mxu0 0.0
    %90 = vmatpush1.msra.mxu0 0.0
    %91 = vmatprep.subr.mxu0 0.0
    %92 = vmatpush1.msra.mxu0 0.0
    %93 = vmatprep.subr.mxu0 0.0
    %94 = vmatpush1.msra.mxu0 0.0
    %95 = vmatprep.subr.mxu0 0.0
    %96 = vmatpush1.msra.mxu0 0.0
    %97 = vmatprep.mubr.f32.mxu0 0.0
    %98 = vmatmul.mubr.f32.gmra.mrb[0].mxu0 %v31
    %v99 = vpop.f32.mrb[0].mxu0
    %v100 = vadd.f32 %v28, %v99
    %v101 = vpop.f32.mrb[0].mxu0
    %102 = vdwg.mxu0
    %103 = vst [vmem:[%s2] sm:$0xf] %v100
    %v104 = vlaneseq
    %v105 = vshrl.u32 %v104, 7
    %v106 = vlaneseq
    %v107 = vand.u32 %v106, 127
    %vm108 = vcmp.eq.s32.totalorder %v105, %v107
    %v109 = vsel %vm108, 1, 0
    %v110 = vcvt.s32.f32 %v109
    %111 = vmatprep.subr.mxu0 0.0
    %112 = vmatpush1.xpose.msra.mxu0 %v31
    %113 = vmatprep.subr.mxu0 0.0
    %114 = vmatpush1.xpose.msra.mxu0 0.0
    %115 = vmatprep.subr.mxu0 0.0
    %116 = vmatpush1.xpose.msra.mxu0 0.0
    %117 = vmatprep.subr.mxu0 0.0
    %118 = vmatpush1.xpose.msra.mxu0 0.0
    %119 = vmatprep.subr.mxu0 0.0
    %120 = vmatpush1.xpose.msra.mxu0 0.0
    %121 = vmatprep.subr.mxu0 0.0
    %122 = vmatpush1.xpose.msra.mxu0 0.0
    %123 = vmatprep.subr.mxu0 0.0
    %124 = vmatpush1.xpose.msra.mxu0 0.0
    %125 = vmatprep.subr.mxu0 0.0
    %126 = vmatpush1.xpose.msra.mxu0 0.0
    %127 = vmatprep.subr.mxu0 0.0
    %128 = vmatpush1.xpose.msra.mxu0 0.0
    %129 = vmatprep.subr.mxu0 0.0
    %130 = vmatpush1.xpose.msra.mxu0 0.0
    %131 = vmatprep.subr.mxu0 0.0
    %132 = vmatpush1.xpose.msra.mxu0 0.0
    %133 = vmatprep.subr.mxu0 0.0
    %134 = vmatpush1.xpose.msra.mxu0 0.0
    %135 = vmatprep.subr.mxu0 0.0
    %136 = vmatpush1.xpose.msra.mxu0 0.0
    %137 = vmatprep.subr.mxu0 0.0
    %138 = vmatpush1.xpose.msra.mxu0 0.0
    %139 = vmatprep.subr.mxu0 0.0
    %140 = vmatpush1.xpose.msra.mxu0 0.0
    %141 = vmatprep.subr.mxu0 0.0
    %142 = vmatpush1.xpose.msra.mxu0 0.0
    %143 = vmatprep.subr.mxu0 0.0
    %144 = vmatpush1.xpose.msra.mxu0 0.0
    %145 = vmatprep.subr.mxu0 0.0
    %146 = vmatpush1.xpose.msra.mxu0 0.0
    %147 = vmatprep.subr.mxu0 0.0
    %148 = vmatpush1.xpose.msra.mxu0 0.0
    %149 = vmatprep.subr.mxu0 0.0
    %150 = vmatpush1.xpose.msra.mxu0 0.0
    %151 = vmatprep.subr.mxu0 0.0
    %152 = vmatpush1.xpose.msra.mxu0 0.0
    %153 = vmatprep.subr.mxu0 0.0
    %154 = vmatpush1.xpose.msra.mxu0 0.0
    %155 = vmatprep.subr.mxu0 0.0
    %156 = vmatpush1.xpose.msra.mxu0 0.0
    %157 = vmatprep.subr.mxu0 0.0
    %158 = vmatpush1.xpose.msra.mxu0 0.0
    %159 = vmatprep.subr.mxu0 0.0
    %160 = vmatpush1.xpose.msra.mxu0 0.0
    %161 = vmatprep.subr.mxu0 0.0
    %162 = vmatpush1.xpose.msra.mxu0 0.0
    %163 = vmatprep.subr.mxu0 0.0
    %164 = vmatpush1.xpose.msra.mxu0 0.0
    %165 = vmatprep.subr.mxu0 0.0
    %166 = vmatpush1.xpose.msra.mxu0 0.0
    %167 = vmatprep.subr.mxu0 0.0
    %168 = vmatpush1.xpose.msra.mxu0 0.0
    %169 = vmatprep.subr.mxu0 0.0
    %170 = vmatpush1.xpose.msra.mxu0 0.0
    %171 = vmatprep.subr.mxu0 0.0
    %172 = vmatpush1.xpose.msra.mxu0 0.0
    %173 = vmatprep.subr.mxu0 0.0
    %174 = vmatpush1.xpose.msra.mxu0 0.0
    %175 = vmatprep.mubr.f32.mxu0 0.0
    %176 = vmatmul.mubr.f32.gmra.mrb[0].mxu0 %v31
    %v177 = vpop.f32.mrb[0].mxu0
    %v178 = vadd.f32 1.0, %v177
    %v179 = vpop.f32.mrb[0].mxu0
    %180 = vdwg.mxu0
    %v181 = vmul.f32 %v178, 2.0
    %v182 = vmul.f32 %v110, 1e-06
    %v183 = vadd.f32 %v181, %v182
    %vm184 = vcmask 27648
    %185 = vst.msk [vmem:[#allocation2] sm:$0xf] %vm184, %v183
    %v186 = vmul.u32 %v105, 16
    %vm187 = vcmp.ge.s32.totalorder %v107, %v186
    %v188 = vadd.s32 %v105, 1
    %v189 = vmul.u32 %v188, 16
    %vm190 = vcmp.lt.s32.totalorder %v107, %v189
    %vm191 = vmand %vm187, %vm190
    %v192 = vsel %vm191, 0.0625, 0.0
    %193 = vmatprep.subr.mxu0 0.0
    %194 = vmatpush1.xpose.msra.mxu0 %v192
    %195 = vmatprep.subr.mxu0 0.0
    %196 = vmatpush1.xpose.msra.mxu0 0.0
    %197 = vmatprep.subr.mxu0 0.0
    %198 = vmatpush1.xpose.msra.mxu0 0.0
    %199 = vmatprep.subr.mxu0 0.0
    %200 = vmatpush1.xpose.msra.mxu0 0.0
    %201 = vmatprep.subr.mxu0 0.0
    %202 = vmatpush1.xpose.msra.mxu0 0.0
    %203 = vmatprep.subr.mxu0 0.0
    %204 = vmatpush1.xpose.msra.mxu0 0.0
    %205 = vmatprep.subr.mxu0 0.0
    %206 = vmatpush1.xpose.msra.mxu0 0.0
    %207 = vmatprep.subr.mxu0 0.0
    %208 = vmatpush1.xpose.msra.mxu0 0.0
    %209 = vmatprep.subr.mxu0 0.0
    %210 = vmatpush1.xpose.msra.mxu0 0.0
    %211 = vmatprep.subr.mxu0 0.0
    %212 = vmatpush1.xpose.msra.mxu0 0.0
    %213 = vmatprep.subr.mxu0 0.0
    %214 = vmatpush1.xpose.msra.mxu0 0.0
    %215 = vmatprep.subr.mxu0 0.0
    %216 = vmatpush1.xpose.msra.mxu0 0.0
    %217 = vmatprep.subr.mxu0 0.0
    %218 = vmatpush1.xpose.msra.mxu0 0.0
    %219 = vmatprep.subr.mxu0 0.0
    %220 = vmatpush1.xpose.msra.mxu0 0.0
    %221 = vmatprep.subr.mxu0 0.0
    %222 = vmatpush1.xpose.msra.mxu0 0.0
    %223 = vmatprep.subr.mxu0 0.0
    %224 = vmatpush1.xpose.msra.mxu0 0.0
    %225 = vmatprep.subr.mxu0 0.0
    %226 = vmatpush1.xpose.msra.mxu0 0.0
    %227 = vmatprep.subr.mxu0 0.0
    %228 = vmatpush1.xpose.msra.mxu0 0.0
    %229 = vmatprep.subr.mxu0 0.0
    %230 = vmatpush1.xpose.msra.mxu0 0.0
    %231 = vmatprep.subr.mxu0 0.0
    %232 = vmatpush1.xpose.msra.mxu0 0.0
    %233 = vmatprep.subr.mxu0 0.0
    %234 = vmatpush1.xpose.msra.mxu0 0.0
    %235 = vmatprep.subr.mxu0 0.0
    %236 = vmatpush1.xpose.msra.mxu0 0.0
    %237 = vmatprep.subr.mxu0 0.0
    %238 = vmatpush1.xpose.msra.mxu0 0.0
    %239 = vmatprep.subr.mxu0 0.0
    %240 = vmatpush1.xpose.msra.mxu0 0.0
    %241 = vmatprep.subr.mxu0 0.0
    %242 = vmatpush1.xpose.msra.mxu0 0.0
    %243 = vmatprep.subr.mxu0 0.0
    %244 = vmatpush1.xpose.msra.mxu0 0.0
    %245 = vmatprep.subr.mxu0 0.0
    %246 = vmatpush1.xpose.msra.mxu0 0.0
    %247 = vmatprep.subr.mxu0 0.0
    %248 = vmatpush1.xpose.msra.mxu0 0.0
    %249 = vmatprep.subr.mxu0 0.0
    %250 = vmatpush1.xpose.msra.mxu0 0.0
    %251 = vmatprep.subr.mxu0 0.0
    %252 = vmatpush1.xpose.msra.mxu0 0.0
    %253 = vmatprep.subr.mxu0 0.0
    %254 = vmatpush1.xpose.msra.mxu0 0.0
    %255 = vmatprep.subr.mxu0 0.0
    %256 = vmatpush1.xpose.msra.mxu0 0.0
    %257 = vmatprep.mubr.f32.mxu0 0.0
    %258 = vmatmul.mubr.f32.gmra.mrb[0].mxu0 %v100
    %v259 = vpop.f32.mrb[0].mxu0
    %v260 = vadd.f32 0.0, %v259
    %v261 = vpop.f32.mrb[0].mxu0
    %262 = vdwg.mxu0
    %v263 = vsub.f32 %v20, %v260
    %v264 = vmul.f32 %v263, %v263
    %vm265 = vcmask 60416
    %v266 = vsel %vm265, %v264, 0.0
    %267 = vadd.xlane.f32.xlu0 %v266
    %v268 = vpop.xlane.xlu0 %267
    %v269 = vrot.slane %v268, 4
    %v270 = vadd.f32 %v268, %v269
    %v271 = vrot.slane %v270, 2
    %v272 = vadd.f32 %v270, %v271
    %v273 = vrot.slane %v272, 1
    %v274 = vadd.f32 %v272, %v273
    %s275 = vtos %v274
    %s276 = smul.f32 %s275, 0.125
    %s277 = scalar_lea.smem [#allocation7], 0
    %278 = sst [smem:[%s277]] %s276
    %v279 = vsub.f32 0.0, %v263
    %vm280 = vcmp.eq.s32.totalorder %v105, 0
    %v281 = vsel %vm280, %v183, 0.0
    %v282 = vsel %vm184, %v281, 0.0
    %v283 = vrot.slane %v282, 4
    %v284 = vadd.f32 %v282, %v283
    %v285 = vrot.slane %v284, 2
    %v286 = vadd.f32 %v284, %v285
    %v287 = vrot.slane %v286, 1
    %v288 = vadd.f32 %v286, %v287
    %v289 = vsel %vm280, %v279, 0.0
    %v290 = vsel %vm265, %v289, 0.0
    %v291 = vrot.slane %v290, 4
    %v292 = vadd.f32 %v290, %v291
    %v293 = vrot.slane %v292, 2
    %v294 = vadd.f32 %v292, %v293
    %v295 = vrot.slane %v294, 1
    %v296 = vadd.f32 %v294, %v295
    %vm297 = vcmp.eq.s32.totalorder %v107, 0
    %v298 = vsel %vm297, %v288, 0.0
    %vm299 = vcmask 31744
    %v300 = vsel %vm299, %v298, 0.0
    %301 = vadd.xlane.f32.xlu0 %v300
    %v302 = vpop.xlane.xlu0 %301
    %v303 = vsel %vm297, %v183, 0.0
    %v304 = vsel %vm184, %v303, 0.0
    %305 = vadd.xlane.f32.xlu0 %v304
    %v306 = vpop.xlane.xlu0 %305
    %v307 = vrcp.pop %v302
    %v308 = vmul.f32 %v288, %v307
    %v309 = vmul.f32 %v296, %v307
    %v310 = vmul.f32 %v306, %v308
    %v311 = vsub.f32 %v183, %v310
    %v312 = vsel %vm280, %v308, %v311
    %v313 = vmul.f32 %v306, %v309
    %v314 = vsub.f32 %v279, %v313
    %v315 = vsel %vm280, %v309, %v314
    %vm316 = vcmp.eq.s32.totalorder %v105, 1
    %v317 = vsel %vm316, %v312, 0.0
    %v318 = vsel %vm184, %v317, 0.0
    %v319 = vrot.slane %v318, 4
    %v320 = vadd.f32 %v318, %v319
    %v321 = vrot.slane %v320, 2
    %v322 = vadd.f32 %v320, %v321
    %v323 = vrot.slane %v322, 1
    %v324 = vadd.f32 %v322, %v323
    %v325 = vsel %vm316, %v315, 0.0
    %v326 = vsel %vm265, %v325, 0.0
    %v327 = vrot.slane %v326, 4
    %v328 = vadd.f32 %v326, %v327
    %v329 = vrot.slane %v328, 2
    %v330 = vadd.f32 %v328, %v329
    %v331 = vrot.slane %v330, 1
    %v332 = vadd.f32 %v330, %v331
    %vm333 = vcmp.eq.s32.totalorder %v107, 1
    %v334 = vsel %vm333, %v324, 0.0
    %v335 = vsel %vm299, %v334, 0.0
    %336 = vadd.xlane.f32.xlu0 %v335
    %v337 = vpop.xlane.xlu0 %336
    %v338 = vsel %vm333, %v312, 0.0
    %v339 = vsel %vm184, %v338, 0.0
    %340 = vadd.xlane.f32.xlu0 %v339
    %v341 = vpop.xlane.xlu0 %340
    %v342 = vrcp.pop %v337
    %v343 = vmul.f32 %v324, %v342
    %v344 = vmul.f32 %v332, %v342
    %v345 = vmul.f32 %v341, %v343
    %v346 = vsub.f32 %v312, %v345
    %v347 = vsel %vm316, %v343, %v346
    %v348 = vmul.f32 %v341, %v344
    %v349 = vsub.f32 %v315, %v348
    %v350 = vsel %vm316, %v344, %v349
    %vm351 = vcmp.eq.s32.totalorder %v105, 2
    %v352 = vsel %vm351, %v347, 0.0
    %v353 = vsel %vm184, %v352, 0.0
    %v354 = vrot.slane %v353, 4
    %v355 = vadd.f32 %v353, %v354
    %v356 = vrot.slane %v355, 2
    %v357 = vadd.f32 %v355, %v356
    %v358 = vrot.slane %v357, 1
    %v359 = vadd.f32 %v357, %v358
    %v360 = vsel %vm351, %v350, 0.0
    %v361 = vsel %vm265, %v360, 0.0
    %v362 = vrot.slane %v361, 4
    %v363 = vadd.f32 %v361, %v362
    %v364 = vrot.slane %v363, 2
    %v365 = vadd.f32 %v363, %v364
    %v366 = vrot.slane %v365, 1
    %v367 = vadd.f32 %v365, %v366
    %vm368 = vcmp.eq.s32.totalorder %v107, 2
    %v369 = vsel %vm368, %v359, 0.0
    %v370 = vsel %vm299, %v369, 0.0
    %371 = vadd.xlane.f32.xlu0 %v370
    %v372 = vpop.xlane.xlu0 %371
    %v373 = vsel %vm368, %v347, 0.0
    %v374 = vsel %vm184, %v373, 0.0
    %375 = vadd.xlane.f32.xlu0 %v374
    %v376 = vpop.xlane.xlu0 %375
    %v377 = vrcp.pop %v372
    %v378 = vmul.f32 %v359, %v377
    %v379 = vmul.f32 %v367, %v377
    %v380 = vmul.f32 %v376, %v378
    %v381 = vsub.f32 %v347, %v380
    %v382 = vsel %vm351, %v378, %v381
    %v383 = vmul.f32 %v376, %v379
    %v384 = vsub.f32 %v350, %v383
    %v385 = vsel %vm351, %v379, %v384
    %vm386 = vcmp.eq.s32.totalorder %v105, 3
    %v387 = vsel %vm386, %v382, 0.0
    %v388 = vsel %vm184, %v387, 0.0
    %v389 = vrot.slane %v388, 4
    %v390 = vadd.f32 %v388, %v389
    %v391 = vrot.slane %v390, 2
    %v392 = vadd.f32 %v390, %v391
    %v393 = vrot.slane %v392, 1
    %v394 = vadd.f32 %v392, %v393
    %v395 = vsel %vm386, %v385, 0.0
    %v396 = vsel %vm265, %v395, 0.0
    %v397 = vrot.slane %v396, 4
    %v398 = vadd.f32 %v396, %v397
    %v399 = vrot.slane %v398, 2
    %v400 = vadd.f32 %v398, %v399
    %v401 = vrot.slane %v400, 1
    %v402 = vadd.f32 %v400, %v401
    %vm403 = vcmp.eq.s32.totalorder %v107, 3
    %v404 = vsel %vm403, %v394, 0.0
    %v405 = vsel %vm299, %v404, 0.0
    %406 = vadd.xlane.f32.xlu0 %v405
    %v407 = vpop.xlane.xlu0 %406
    %v408 = vsel %vm403, %v382, 0.0
    %v409 = vsel %vm184, %v408, 0.0
    %410 = vadd.xlane.f32.xlu0 %v409
    %v411 = vpop.xlane.xlu0 %410
    %v412 = vrcp.pop %v407
    %v413 = vmul.f32 %v402, %v412
    %v414 = vmul.f32 %v411, %v413
    %v415 = vsub.f32 %v385, %v414
    %v416 = vsel %vm386, %v413, %v415
    %417 = vst.msk [vmem:[#allocation5] sm:$0xf] %vm265, %v416
    // Predicated region
    $region10: #{sobolev_forward.1} parent=1 // pred_check
      _
    $region11: #{sobolev_forward.1} parent=1 // pred_check_branch
      %419 = sbr.rel (0) target = $region13
    $region12: #{sobolev_forward.1} parent=1 // pred_region
      _
    $region13: #{sobolev_forward.1} parent=1 // pred_fallthru
      _
    // Predicated region
    $region14: #{sobolev_forward.1} parent=1 // pred_check
      _
    $region15: #{sobolev_forward.1} parent=1 // pred_check_branch
      %421 = sbr.rel (0) target = $region17
    $region16: #{sobolev_forward.1} parent=1 // pred_region
      %s423 = ssub.s32 64, 64
      %424 = vsyncadd [#allocation3], %s423
      %s426 = sshll.u32 [#allocation2], 4
      %s427 = int_to_ptr.vmem [resolvable:$true] %s426
      %429 = dma.vmem_to_hbm [thread:$0]  %s427, 64, %s3, [#allocation3]
    $region17: #{sobolev_forward.1} parent=1 // pred_fallthru
      _
    // Predicated region
    $region18: #{sobolev_forward.1} parent=1 // pred_check
      _
    $region19: #{sobolev_forward.1} parent=1 // pred_check_branch
      %431 = sbr.rel (0) target = $region21
    $region20: #{sobolev_forward.1} parent=1 // pred_region
      %s433 = ssub.s32 64, 64
      %434 = vsyncadd [#allocation6], %s433
      %s436 = sshll.u32 [#allocation5], 4
      %s437 = int_to_ptr.vmem [resolvable:$true] %s436
      %439 = dma.vmem_to_hbm [thread:$0]  %s437, 64, %s4, [#allocation6]
    $region21: #{sobolev_forward.1} parent=1 // pred_fallthru
      _
    // Predicated region
    $region22: #{sobolev_forward.1} parent=1 // pred_check
      _
    $region23: #{sobolev_forward.1} parent=1 // pred_check_branch
      %441 = sbr.rel (0) target = $region25
    $region24: #{sobolev_forward.1} parent=1 // pred_region
      %s443 = ssub.s32 16, 16
      %444 = vsyncadd [#allocation4], %s443
      %447 = dma.smem_to_hbm [#allocation7], 16, %s5, [#allocation4]
    $region25: #{sobolev_forward.1} parent=1 // pred_fallthru
      _
    // Predicated region
    $region26: #{sobolev_forward.1} parent=1 // pred_check
      _
    $region27: #{sobolev_forward.1} parent=1 // pred_check_branch
      %449 = sbr.rel (0) target = $region29
    $region28: #{sobolev_forward.1} parent=1 // pred_region
      _
    $region29: #{sobolev_forward.1} parent=1 // pred_fallthru
      _
    // Predicated region
    $region30: #{sobolev_forward.1} parent=1 // pred_check
      _
    $region31: #{sobolev_forward.1} parent=1 // pred_check_branch
      %451 = sbr.rel (0) target = $region33
    $region32: #{sobolev_forward.1} parent=1 // pred_region
      %452 = dma.done [#allocation3], 64
    $region33: #{sobolev_forward.1} parent=1 // pred_fallthru
      _
    // Predicated region
    $region34: #{sobolev_forward.1} parent=1 // pred_check
      _
    $region35: #{sobolev_forward.1} parent=1 // pred_check_branch
      %454 = sbr.rel (0) target = $region37
    $region36: #{sobolev_forward.1} parent=1 // pred_region
      %455 = dma.done [#allocation6], 64
    $region37: #{sobolev_forward.1} parent=1 // pred_fallthru
      _
    // Predicated region
    $region38: #{sobolev_forward.1} parent=1 // pred_check
      _
    $region39: #{sobolev_forward.1} parent=1 // pred_check_branch
      %457 = sbr.rel (0) target = $region41
    $region40: #{sobolev_forward.1} parent=1 // pred_region
      %458 = dma.done [#allocation4], 16
    $region41: #{sobolev_forward.1} parent=1 // pred_fallthru
      _
    %459 = sfence
    %460 = vsyncpa [#allocation3], 1
    %461 = vsyncpa [#allocation6], 1
    %462 = vsyncpa [#allocation4], 1

</llo_original>
